<compile_context>
chip_gen: v6e
topology: v6e:2x2x1
jax: 0.10.0
libtpu: 0.0.40
codegen_flags: <defaults>
</compile_context>

<pallas_src>
import jax
import jax.numpy as jnp
from jax import lax
from jax.experimental import pallas as pl
from jax.experimental.pallas import tpu as pltpu


def _round_up(x, m):
    return ((x + m - 1) // m) * m


def _pick_tile_b(B, cap=2048):
    """Lane-aligned batch tile; >=2 grid steps when B > 128 (v7x megacore)."""
    if B <= 128:
        return 128
    half = _round_up((B + 1) // 2, 128)
    return min(cap, half)


def critic_kernel(state_ref, action_ref,
                  w1_ref, b1_ref,
                  w2s_ref, w2a_ref, b2_ref,
                  w3_ref, b3_ref,
                  w4_ref, b4_ref,
                  out_ref):
    # Compute dtype is carried by the (wrapper-cast) weight matrices.
    cdt = w1_ref.dtype

    # Batch-major input tiles: state [TB, S], action [TB, A].
    st = state_ref[...].astype(cdt)
    ac = action_ref[...].astype(cdt)

    # Contract the LAST dim of both operands: W[out,in] x X[TB,in] -> [out,TB]
    dn = (((1,), (1,)), ((), ()))

    # fcs1 + relu : [64, TB]
    xs = lax.dot_general(w1_ref[...], st, dn,
                         preferred_element_type=jnp.float32) + b1_ref[...]
    xs = jnp.maximum(xs, 0.0)

    # fc2 on cat([xs, action]) + relu, as a split matmul : [32, TB]
    h2 = (jnp.dot(w2s_ref[...], xs.astype(cdt),
                  preferred_element_type=jnp.float32)
          + lax.dot_general(w2a_ref[...], ac, dn,
                            preferred_element_type=jnp.float32)
          + b2_ref[...])
    h2 = jnp.maximum(h2, 0.0)

    # fc3 + relu : [32, TB]
    h3 = jnp.dot(w3_ref[...], h2.astype(cdt),
                 preferred_element_type=jnp.float32) + b3_ref[...]
    h3 = jnp.maximum(h3, 0.0)

    # fc4 (no activation) : [1, TB] lane-dense output slab
    out_ref[...] = (jnp.dot(w4_ref[...], h3.astype(cdt),
                            preferred_element_type=jnp.float32)
                    + b4_ref[...]).astype(out_ref.dtype)


def critic_forward(state, action, params, tile_b=None,
                   compute_dtype=jnp.bfloat16):
    """state: [B, state_size] f32, action: [B, action_size] f32 -> [B, 1] f32.

    compute_dtype: dtype fed to the MXU (bf16 default; f32 for exact parity).
    Accumulation / biases / output are always f32.
    """
    B, S = state.shape
    A = action.shape[1]
    (w1, b1, w2s, w2a, b2, w3, b3, w4, b4) = params

    # Weight matrices -> compute dtype (tiny, VMEM-resident); biases stay f32.
    cdt = compute_dtype
    w1c, w2sc, w2ac, w3c, w4c = (w.astype(cdt) for w in (w1, w2s, w2a, w3, w4))
    b1f, b2f, b3f, b4f = (b.astype(jnp.float32) for b in (b1, b2, b3, b4))

    if tile_b is None:
        tile_b = _pick_tile_b(B)
    # Note: a manually supplied tile_b must be a multiple of 128 (lane axis of
    # the intermediates and of the [1, tile_b] output block).

    grid = (pl.cdiv(B, tile_b),)

    # Weights/biases: full-array blocks, constant index_map -> VMEM-resident.
    def resident(a):
        return pl.BlockSpec(a.shape, lambda i: (0,) * a.ndim)

    out = pl.pallas_call(
        critic_kernel,
        out_shape=jax.ShapeDtypeStruct((1, B), jnp.float32),
        grid=grid,
        in_specs=[
            pl.BlockSpec((tile_b, S), lambda i: (i, 0)),   # state tile (batch-major)
            pl.BlockSpec((tile_b, A), lambda i: (i, 0)),   # action tile (batch-major)
            resident(w1c), resident(b1f),
            resident(w2sc), resident(w2ac), resident(b2f),
            resident(w3c), resident(b3f),
            resident(w4c), resident(b4f),
        ],
        out_specs=pl.BlockSpec((1, tile_b), lambda i: (0, i)),
        compiler_params=pltpu.CompilerParams(
            dimension_semantics=("parallel",)),
    )(state, action, w1c, b1f, w2sc, w2ac, b2f, w3c, b3f, w4c, b4f)

    return out.reshape(B, 1)


def init_critic_params(key, state_size, action_size,
                       fcs1_units=64, fc2_units=32, fc3_units=32):
    """Synthetic init mirroring Critic.reset_parameters ranges.

    Weights are stored in PyTorch layout [out_features, in_features]; biases
    are [out_features, 1] so they broadcast over the batch (lane) axis in the
    feature-major kernel.  hidden_init in the reference uses
    weight.size()[0] == out_features, which we mirror here (bias init ranges
    are synthetic and irrelevant to the kernel math).
    """
    ks = jax.random.split(key, 8)

    def uniform(k, shape, lim):
        return jax.random.uniform(k, shape, jnp.float32, -lim, lim)

    lim1 = 1.0 / (fcs1_units ** 0.5)
    lim2 = 1.0 / (fc2_units ** 0.5)
    lim3 = 1.0 / (fc3_units ** 0.5)

    w1 = uniform(ks[0], (fcs1_units, state_size), lim1)
    b1 = uniform(ks[1], (fcs1_units, 1), lim1)

    w2 = uniform(ks[2], (fc2_units, fcs1_units + action_size), lim2)
    w2s = w2[:, :fcs1_units]      # applied to xs
    w2a = w2[:, fcs1_units:]      # applied to action (split form of the concat)
    b2 = uniform(ks[3], (fc2_units, 1), lim2)

    w3 = uniform(ks[4], (fc3_units, fc2_units), lim3)
    b3 = uniform(ks[5], (fc3_units, 1), lim3)

    # fc4 weight uses the explicit +/-3e-3 range.
    w4 = uniform(ks[6], (1, fc3_units), 0.003)
    b4 = uniform(ks[7], (1, 1), 1.0 / (fc3_units ** 0.5))

    return (w1, b1, w2s, w2a, b2, w3, b3, w4, b4)


def critic_ref(state, action, params):
    """Pure-JAX f32 reference (batch-major, explicit concat) for validation."""
    (w1, b1, w2s, w2a, b2, w3, b3, w4, b4) = params
    xs = jax.nn.relu(state @ w1.T + b1[:, 0])
    x = jnp.concatenate([xs, action], axis=1)
    w2 = jnp.concatenate([w2s, w2a], axis=1)
    x = jax.nn.relu(x @ w2.T + b2[:, 0])
    x = jax.nn.relu(x @ w3.T + b3[:, 0])
    return x @ w4.T + b4[:, 0]


if __name__ == "__main__":
    batch = 300           # not a multiple of the tile -> exercises ragged path
    state_size = 33       # typical DDPG Reacher dims
    action_size = 4

    key = jax.random.PRNGKey(0)
    kp, ks, ka = jax.random.split(key, 3)

    params = init_critic_params(kp, state_size, action_size)
    state = jax.random.normal(ks, (batch, state_size), jnp.float32)
    action = jax.random.normal(ka, (batch, action_size), jnp.float32)

    # Default tile selection: tile_b=256 -> 2-step "parallel" grid (both v7x
    # TensorCores busy) with a ragged second block (exercises masked stores).
    out = critic_forward(state, action, params)
    out = jax.block_until_ready(out)

    ref = critic_ref(state, action, params)
    assert out.shape == (batch, 1), out.shape
    # bf16 MXU inputs with f32 accumulation -> looser tolerance than exact f32.
    assert jnp.allclose(out, ref, atol=2e-2, rtol=2e-2), \
        float(jnp.max(jnp.abs(out - ref)))

    # Exact-parity path (f32 end-to-end).
    out_f32 = jax.block_until_ready(
        critic_forward(state, action, params, compute_dtype=jnp.float32))
    assert jnp.allclose(out_f32, ref, atol=1e-5, rtol=1e-5), \
        float(jnp.max(jnp.abs(out_f32 - ref)))

    print("KERNEL_OK")
</pallas_src>

<mosaic_0001>
module attributes {stable_mosaic.version = 11 : i64} {
  func.func @critic_kernel(%arg0: i32, %arg1: memref<256x33xf32, #tpu.memory_space<vmem>>, %arg2: memref<256x4xf32, #tpu.memory_space<vmem>>, %arg3: memref<64x33xbf16, #tpu.memory_space<vmem>>, %arg4: memref<64x1xf32, #tpu.memory_space<vmem>>, %arg5: memref<32x64xbf16, #tpu.memory_space<vmem>>, %arg6: memref<32x4xbf16, #tpu.memory_space<vmem>>, %arg7: memref<32x1xf32, #tpu.memory_space<vmem>>, %arg8: memref<32x32xbf16, #tpu.memory_space<vmem>>, %arg9: memref<32x1xf32, #tpu.memory_space<vmem>>, %arg10: memref<1x32xbf16, #tpu.memory_space<vmem>>, %arg11: memref<1x1xf32, #tpu.memory_space<vmem>>, %arg12: memref<1x256xf32, #tpu.memory_space<vmem>>) attributes {dimension_semantics = [#tpu.dimension_semantics<parallel>], iteration_bounds = array<i64: 2>, scalar_prefetch = 0 : i64, scratch_operands = 0 : i64, tpu.core_type = #tpu.core_type<tc>, window_params = [{transform_indices = @transform_0, window_bounds = array<i64: 256, 33>}, {transform_indices = @transform_1, window_bounds = array<i64: 256, 4>}, {pipeline_mode = #tpu.pipeline_mode<synchronous>, transform_indices = @transform_2, window_bounds = array<i64: 64, 33>}, {pipeline_mode = #tpu.pipeline_mode<synchronous>, transform_indices = @transform_3, window_bounds = array<i64: 64, 1>}, {pipeline_mode = #tpu.pipeline_mode<synchronous>, transform_indices = @transform_4, window_bounds = array<i64: 32, 64>}, {pipeline_mode = #tpu.pipeline_mode<synchronous>, transform_indices = @transform_5, window_bounds = array<i64: 32, 4>}, {pipeline_mode = #tpu.pipeline_mode<synchronous>, transform_indices = @transform_6, window_bounds = array<i64: 32, 1>}, {pipeline_mode = #tpu.pipeline_mode<synchronous>, transform_indices = @transform_7, window_bounds = array<i64: 32, 32>}, {pipeline_mode = #tpu.pipeline_mode<synchronous>, transform_indices = @transform_8, window_bounds = array<i64: 32, 1>}, {pipeline_mode = #tpu.pipeline_mode<synchronous>, transform_indices = @transform_9, window_bounds = array<i64: 1, 32>}, {pipeline_mode = #tpu.pipeline_mode<synchronous>, transform_indices = @transform_10, window_bounds = array<i64: 1, 1>}, {transform_indices = @transform_11, window_bounds = array<i64: 1, 256>}]} {
    %c0 = arith.constant 0 : index
    %c0_0 = arith.constant 0 : index
    %0 = vector.load %arg1[%c0, %c0_0] : memref<256x33xf32, #tpu.memory_space<vmem>>, vector<256x33xf32>
    %1 = arith.truncf %0 : vector<256x33xf32> to vector<256x33xbf16>
    %c0_1 = arith.constant 0 : index
    %c0_2 = arith.constant 0 : index
    %2 = vector.load %arg2[%c0_1, %c0_2] : memref<256x4xf32, #tpu.memory_space<vmem>>, vector<256x4xf32>
    %3 = arith.truncf %2 : vector<256x4xf32> to vector<256x4xbf16>
    %c0_3 = arith.constant 0 : index
    %c0_4 = arith.constant 0 : index
    %4 = vector.load %arg3[%c0_3, %c0_4] : memref<64x33xbf16, #tpu.memory_space<vmem>>, vector<64x33xbf16>
    %cst = arith.constant dense<0.000000e+00> : vector<64x256xf32>
    %5 = tpu.matmul %4, %1, %cst {dimension_numbers = #tpu.dot_dimension_numbers<[1], [1], [0], [0], [0, 0, 1, 0], [], []>} : vector<64x33xbf16>, vector<256x33xbf16>, vector<64x256xf32> -> vector<64x256xf32>
    %c0_5 = arith.constant 0 : index
    %c0_6 = arith.constant 0 : index
    %6 = vector.load %arg4[%c0_5, %c0_6] : memref<64x1xf32, #tpu.memory_space<vmem>>, vector<64x1xf32>
    %7 = vector.broadcast %6 : vector<64x1xf32> to vector<64x256xf32>
    %8 = arith.addf %5, %7 : vector<64x256xf32>
    %cst_7 = arith.constant 0.000000e+00 : f32
    %9 = vector.broadcast %cst_7 : f32 to vector<64x256xf32>
    %10 = arith.maximumf %8, %9 : vector<64x256xf32>
    %c0_8 = arith.constant 0 : index
    %c0_9 = arith.constant 0 : index
    %11 = vector.load %arg5[%c0_8, %c0_9] : memref<32x64xbf16, #tpu.memory_space<vmem>>, vector<32x64xbf16>
    %12 = arith.truncf %10 : vector<64x256xf32> to vector<64x256xbf16>
    %cst_10 = arith.constant dense<0.000000e+00> : vector<32x256xf32>
    %13 = tpu.matmul %11, %12, %cst_10 {dimension_numbers = #tpu.dot_dimension_numbers<[1], [0], [0], [1], [0, 0, 1, 1], [], []>} : vector<32x64xbf16>, vector<64x256xbf16>, vector<32x256xf32> -> vector<32x256xf32>
    %c0_11 = arith.constant 0 : index
    %c0_12 = arith.constant 0 : index
    %14 = vector.load %arg6[%c0_11, %c0_12] : memref<32x4xbf16, #tpu.memory_space<vmem>>, vector<32x4xbf16>
    %cst_13 = arith.constant dense<0.000000e+00> : vector<32x256xf32>
    %15 = tpu.matmul %14, %3, %cst_13 {dimension_numbers = #tpu.dot_dimension_numbers<[1], [1], [0], [0], [0, 0, 1, 0], [], []>} : vector<32x4xbf16>, vector<256x4xbf16>, vector<32x256xf32> -> vector<32x256xf32>
    %16 = arith.addf %13, %15 : vector<32x256xf32>
    %c0_14 = arith.constant 0 : index
    %c0_15 = arith.constant 0 : index
    %17 = vector.load %arg7[%c0_14, %c0_15] : memref<32x1xf32, #tpu.memory_space<vmem>>, vector<32x1xf32>
    %18 = vector.broadcast %17 : vector<32x1xf32> to vector<32x256xf32>
    %19 = arith.addf %16, %18 : vector<32x256xf32>
    %cst_16 = arith.constant 0.000000e+00 : f32
    %20 = vector.broadcast %cst_16 : f32 to vector<32x256xf32>
    %21 = arith.maximumf %19, %20 : vector<32x256xf32>
    %c0_17 = arith.constant 0 : index
    %c0_18 = arith.constant 0 : index
    %22 = vector.load %arg8[%c0_17, %c0_18] : memref<32x32xbf16, #tpu.memory_space<vmem>>, vector<32x32xbf16>
    %23 = arith.truncf %21 : vector<32x256xf32> to vector<32x256xbf16>
    %cst_19 = arith.constant dense<0.000000e+00> : vector<32x256xf32>
    %24 = tpu.matmul %22, %23, %cst_19 {dimension_numbers = #tpu.dot_dimension_numbers<[1], [0], [0], [1], [0, 0, 1, 1], [], []>} : vector<32x32xbf16>, vector<32x256xbf16>, vector<32x256xf32> -> vector<32x256xf32>
    %c0_20 = arith.constant 0 : index
    %c0_21 = arith.constant 0 : index
    %25 = vector.load %arg9[%c0_20, %c0_21] : memref<32x1xf32, #tpu.memory_space<vmem>>, vector<32x1xf32>
    %26 = vector.broadcast %25 : vector<32x1xf32> to vector<32x256xf32>
    %27 = arith.addf %24, %26 : vector<32x256xf32>
    %cst_22 = arith.constant 0.000000e+00 : f32
    %28 = vector.broadcast %cst_22 : f32 to vector<32x256xf32>
    %29 = arith.maximumf %27, %28 : vector<32x256xf32>
    %c0_23 = arith.constant 0 : index
    %c0_24 = arith.constant 0 : index
    %30 = vector.load %arg10[%c0_23, %c0_24] : memref<1x32xbf16, #tpu.memory_space<vmem>>, vector<1x32xbf16>
    %31 = arith.truncf %29 : vector<32x256xf32> to vector<32x256xbf16>
    %cst_25 = arith.constant dense<0.000000e+00> : vector<1x256xf32>
    %32 = tpu.matmul %30, %31, %cst_25 {dimension_numbers = #tpu.dot_dimension_numbers<[1], [0], [0], [1], [0, 0, 1, 1], [], []>} : vector<1x32xbf16>, vector<32x256xbf16>, vector<1x256xf32> -> vector<1x256xf32>
    %c0_26 = arith.constant 0 : index
    %c0_27 = arith.constant 0 : index
    %33 = vector.load %arg11[%c0_26, %c0_27] : memref<1x1xf32, #tpu.memory_space<vmem>>, vector<1x1xf32>
    %34 = vector.broadcast %33 : vector<1x1xf32> to vector<1x256xf32>
    %35 = arith.addf %32, %34 : vector<1x256xf32>
    %c0_28 = arith.constant 0 : index
    %c0_29 = arith.constant 0 : index
    %36 = vector.load %arg12[%c0_28, %c0_29] : memref<1x256xf32, #tpu.memory_space<vmem>>, vector<1x256xf32>
    tpu.vector_store %arg12[%c0_28, %c0_29], %35 {strides = array<i32>} : memref<1x256xf32, #tpu.memory_space<vmem>>, vector<1x256xf32>,
    return
  }
  func.func @transform_0(%arg0: i32) -> (i32, i32) {
    %c0_i32 = arith.constant 0 : i32
    %c0_i32_0 = arith.constant 0 : i32
    return %arg0, %c0_i32 : i32, i32
  }
  func.func @transform_1(%arg0: i32) -> (i32, i32) {
    %c0_i32 = arith.constant 0 : i32
    %c0_i32_0 = arith.constant 0 : i32
    return %arg0, %c0_i32 : i32, i32
  }
  func.func @transform_2(%arg0: i32) -> (i32, i32) {
    %c0_i32 = arith.constant 0 : i32
    %c0_i32_0 = arith.constant 0 : i32
    %c0_i32_1 = arith.constant 0 : i32
    return %c0_i32, %c0_i32_0 : i32, i32
  }
  func.func @transform_3(%arg0: i32) -> (i32, i32) {
    %c0_i32 = arith.constant 0 : i32
    %c0_i32_0 = arith.constant 0 : i32
    %c0_i32_1 = arith.constant 0 : i32
    return %c0_i32, %c0_i32_0 : i32, i32
  }
  func.func @transform_4(%arg0: i32) -> (i32, i32) {
    %c0_i32 = arith.constant 0 : i32
    %c0_i32_0 = arith.constant 0 : i32
    %c0_i32_1 = arith.constant 0 : i32
    return %c0_i32, %c0_i32_0 : i32, i32
  }
  func.func @transform_5(%arg0: i32) -> (i32, i32) {
    %c0_i32 = arith.constant 0 : i32
    %c0_i32_0 = arith.constant 0 : i32
    %c0_i32_1 = arith.constant 0 : i32
    return %c0_i32, %c0_i32_0 : i32, i32
  }
  func.func @transform_6(%arg0: i32) -> (i32, i32) {
    %c0_i32 = arith.constant 0 : i32
    %c0_i32_0 = arith.constant 0 : i32
    %c0_i32_1 = arith.constant 0 : i32
    return %c0_i32, %c0_i32_0 : i32, i32
  }
  func.func @transform_7(%arg0: i32) -> (i32, i32) {
    %c0_i32 = arith.constant 0 : i32
    %c0_i32_0 = arith.constant 0 : i32
    %c0_i32_1 = arith.constant 0 : i32
    return %c0_i32, %c0_i32_0 : i32, i32
  }
  func.func @transform_8(%arg0: i32) -> (i32, i32) {
    %c0_i32 = arith.constant 0 : i32
    %c0_i32_0 = arith.constant 0 : i32
    %c0_i32_1 = arith.constant 0 : i32
    return %c0_i32, %c0_i32_0 : i32, i32
  }
  func.func @transform_9(%arg0: i32) -> (i32, i32) {
    %c0_i32 = arith.constant 0 : i32
    %c0_i32_0 = arith.constant 0 : i32
    %c0_i32_1 = arith.constant 0 : i32
    return %c0_i32, %c0_i32_0 : i32, i32
  }
  func.func @transform_10(%arg0: i32) -> (i32, i32) {
    %c0_i32 = arith.constant 0 : i32
    %c0_i32_0 = arith.constant 0 : i32
    %c0_i32_1 = arith.constant 0 : i32
    return %c0_i32, %c0_i32_0 : i32, i32
  }
  func.func @transform_11(%arg0: i32) -> (i32, i32) {
    %c0_i32 = arith.constant 0 : i32
    %c0_i32_0 = arith.constant 0 : i32
    return %c0_i32, %arg0 : i32, i32
  }
}

</mosaic_0001>

<llo_original>
// kernel: tpu_custom_call.1
$region0: #{tpu_custom_call.1}
  #allocation0 [shape = 'u32[]', space=smem, size = 0x4, offset = 0x4, fixed_abs, tag = 'smem constant byte address 0x4 - core index']
  #allocation1 [shape = 'u32[144,128]{1,0:T(1,128)}', space=vmem, size = 0x12000, scoped, tag = 'internal scratch']
  #allocation2 [shape = 'f32[1,1]{1,0:T(1,128)S(1)}', space=vmem, size = 0x200, scoped, tag = 'scoped memory for tpu_custom_call.1']
  %s0 = inlined_call_operand.vmem [shape: f32[300,33], index: 0, kind: input, shape index: {}]
  %s1 = inlined_call_operand.vmem [shape: f32[300,4], index: 1, kind: input, shape index: {}]
  %s2 = inlined_call_operand.vmem [shape: bf16[64,33], index: 2, kind: input, shape index: {}]
  %s3 = inlined_call_operand.vmem [shape: f32[64,1], index: 3, kind: input, shape index: {}]
  %s4 = inlined_call_operand.vmem [shape: bf16[32,64], index: 4, kind: input, shape index: {}]
  %s5 = inlined_call_operand.vmem [shape: bf16[32,4], index: 5, kind: input, shape index: {}]
  %s6 = inlined_call_operand.vmem [shape: f32[32,1], index: 6, kind: input, shape index: {}]
  %s7 = inlined_call_operand.vmem [shape: bf16[32,32], index: 7, kind: input, shape index: {}]
  %s8 = inlined_call_operand.vmem [shape: f32[32,1], index: 8, kind: input, shape index: {}]
  %s9 = inlined_call_operand.vmem [shape: bf16[1,32], index: 9, kind: input, shape index: {}]
  %s10 = inlined_call_operand.<no memory space> [shape: f32[1,1], index: 10, kind: input, shape index: {}]
  %s11 = inlined_call_operand.hbm [shape: f32[1,300], index: 11, kind: output, shape index: {}]
  %s12 = sld [smem:[#allocation0]]
  $region77: #{tpu_custom_call.1} parent=0
    _
  %s14 = ssub.s32 1, %s12
  %s15 = scalar_select 0, %s14, %s12
  %v16 = vstv %s10
  %17 = vst [vmem:[#allocation2] sm:$0x1] %v16
  $region1: #{tpu_custom_call.1} parent=0
    #allocation3 [shape = 'u8[2048]{0}', space=vmem, size = 0x800, scoped, tag = 'output window, operand 0']
    #allocation4 [shape = 's32[2]{0}', space=sflag, size = 0x8, scoped, tag = 'scoped memory for tpu_custom_call.1']
    %18 = vsyncpa [#allocation4], 0
    %s19 = scalar_lea.sflag [#allocation4], 1
    %20 = vsyncpa %s19, 0
    loop: start=0, step=1, limit=4
    $region2: #{tpu_custom_call.1} parent=1 // loop_pre_header
      _
    $region3: #{tpu_custom_call.1} parent=1 // loop_header
      %s22 = sphi 0, %s26
      %p23 = scmp.ge.s32.totalorder %s22, 4
      %s32 = sphi 0, %s34
      %s35 = sphi 0, %s32
      %s36 = sphi 0, %s35
      %s52 = sphi 0, %s36
      %s58 = sphi 0, %s60
      %s61 = sphi 0, %s58
      %s62 = sphi 0, %s61
      %s78 = sphi 0, %s62
      %s82 = sphi 0, %s82
      %s84 = sphi 0, %s82
      %s85 = sphi 0, %s84
      %s99 = sphi 0, %s85
      %s103 = sphi 0, %s103
      %s105 = sphi 0, %s103
      %s106 = sphi 0, %s105
      %s120 = sphi 0, %s106
      %s124 = sphi 0, %s124
      %s126 = sphi 0, %s124
      %s127 = sphi 0, %s126
      %s141 = sphi 0, %s127
      %s145 = sphi 0, %s145
      %s147 = sphi 0, %s145
      %s148 = sphi 0, %s147
      %s162 = sphi 0, %s148
      %s166 = sphi 0, %s166
      %s168 = sphi 0, %s166
      %s169 = sphi 0, %s168
      %s183 = sphi 0, %s169
      %s187 = sphi 0, %s187
      %s189 = sphi 0, %s187
      %s190 = sphi 0, %s189
      %s204 = sphi 0, %s190
      %s208 = sphi 0, %s208
      %s210 = sphi 0, %s208
      %s211 = sphi 0, %s210
      %s225 = sphi 0, %s211
      %s229 = sphi 0, %s229
      %s231 = sphi 0, %s229
      %s232 = sphi 0, %s231
      %s246 = sphi 0, %s232
      %s250 = sphi 0, %s250
      %s252 = sphi 0, %s250
      %s253 = sphi 0, %s252
      %s267 = sphi 0, %s253
      %s273 = sphi 0, %s275
      %s276 = sphi 0, %s273
      %s277 = sphi 0, %s276
      %s293 = sphi 0, %s277
    $region4: #{tpu_custom_call.1} parent=1 // loop_header_branch
      %25 = sbr.rel (%p23) target = $region8
    $region5: #{tpu_custom_call.1} parent=1 // loop_body
      %s27 = ssub.s32 %s22, 1
      %s28 = ssub.s32 %s22, 2
      %s29 = sadd.s32 %s22, 1
      %s30 = ssub.s32 %s22, %s29
      %p31 = scmp.eq.s32.totalorder %s30, 0
      %s33 = sadd.s32 %s32, 1
      %s34 = scalar_select %p31, %s32, %s33
      %p37 = pneg %p31
      %p38 = scmp.eq.s32.totalorder %s22, 1
      %p39 = por %p37, %p38
      %p40 = scmp.ne.s32.totalorder %s32, %s35
      %p41 = scmp.eq.s32.totalorder %s22, 0
      %p42 = por %p40, %p41
      %p43 = scmp.ne.s32.totalorder %s32, %s35
      %p44 = scmp.eq.s32.totalorder %s27, 1
      %p45 = por %p43, %p44
      %p46 = scmp.ne.s32.totalorder %s35, %s36
      %p47 = scmp.eq.s32.totalorder %s27, 0
      %p48 = por %p46, %p47
      %p49 = scmp.ne.s32.totalorder %s35, %s36
      %p50 = scmp.eq.s32.totalorder %s28, 1
      %p51 = por %p49, %p50
      %p53 = scmp.ne.s32.totalorder %s36, %s52
      %p54 = scmp.eq.s32.totalorder %s28, 0
      %p55 = por %p53, %p54
      %s56 = ssub.s32 %s22, %s29
      %p57 = scmp.eq.s32.totalorder %s56, 0
      %s59 = sadd.s32 %s58, 1
      %s60 = scalar_select %p57, %s58, %s59
      %p63 = pneg %p57
      %p64 = scmp.eq.s32.totalorder %s22, 1
      %p65 = por %p63, %p64
      %p66 = scmp.ne.s32.totalorder %s58, %s61
      %p67 = scmp.eq.s32.totalorder %s22, 0
      %p68 = por %p66, %p67
      %p69 = scmp.ne.s32.totalorder %s58, %s61
      %p70 = scmp.eq.s32.totalorder %s27, 1
      %p71 = por %p69, %p70
      %p72 = scmp.ne.s32.totalorder %s61, %s62
      %p73 = scmp.eq.s32.totalorder %s27, 0
      %p74 = por %p72, %p73
      %p75 = scmp.ne.s32.totalorder %s61, %s62
      %p76 = scmp.eq.s32.totalorder %s28, 1
      %p77 = por %p75, %p76
      %p79 = scmp.ne.s32.totalorder %s62, %s78
      %p80 = scmp.eq.s32.totalorder %s28, 0
      %p81 = por %p79, %p80
      %s83 = sadd.s32 %s82, 1
      %p86 = scmp.eq.s32.totalorder %s22, 1
      %p87 = scmp.ne.s32.totalorder %s82, %s84
      %p88 = scmp.eq.s32.totalorder %s22, 0
      %p89 = por %p87, %p88
      %p90 = scmp.ne.s32.totalorder %s82, %s84
      %p91 = scmp.eq.s32.totalorder %s27, 1
      %p92 = por %p90, %p91
      %p93 = scmp.ne.s32.totalorder %s84, %s85
      %p94 = scmp.eq.s32.totalorder %s27, 0
      %p95 = por %p93, %p94
      %p96 = scmp.ne.s32.totalorder %s84, %s85
      %p97 = scmp.eq.s32.totalorder %s28, 1
      %p98 = por %p96, %p97
      %p100 = scmp.ne.s32.totalorder %s85, %s99
      %p101 = scmp.eq.s32.totalorder %s28, 0
      %p102 = por %p100, %p101
      %s104 = sadd.s32 %s103, 1
      %p107 = scmp.eq.s32.totalorder %s22, 1
      %p108 = scmp.ne.s32.totalorder %s103, %s105
      %p109 = scmp.eq.s32.totalorder %s22, 0
      %p110 = por %p108, %p109
      %p111 = scmp.ne.s32.totalorder %s103, %s105
      %p112 = scmp.eq.s32.totalorder %s27, 1
      %p113 = por %p111, %p112
      %p114 = scmp.ne.s32.totalorder %s105, %s106
      %p115 = scmp.eq.s32.totalorder %s27, 0
      %p116 = por %p114, %p115
      %p117 = scmp.ne.s32.totalorder %s105, %s106
      %p118 = scmp.eq.s32.totalorder %s28, 1
      %p119 = por %p117, %p118
      %p121 = scmp.ne.s32.totalorder %s106, %s120
      %p122 = scmp.eq.s32.totalorder %s28, 0
      %p123 = por %p121, %p122
      %s125 = sadd.s32 %s124, 1
      %p128 = scmp.eq.s32.totalorder %s22, 1
      %p129 = scmp.ne.s32.totalorder %s124, %s126
      %p130 = scmp.eq.s32.totalorder %s22, 0
      %p131 = por %p129, %p130
      %p132 = scmp.ne.s32.totalorder %s124, %s126
      %p133 = scmp.eq.s32.totalorder %s27, 1
      %p134 = por %p132, %p133
      %p135 = scmp.ne.s32.totalorder %s126, %s127
      %p136 = scmp.eq.s32.totalorder %s27, 0
      %p137 = por %p135, %p136
      %p138 = scmp.ne.s32.totalorder %s126, %s127
      %p139 = scmp.eq.s32.totalorder %s28, 1
      %p140 = por %p138, %p139
      %p142 = scmp.ne.s32.totalorder %s127, %s141
      %p143 = scmp.eq.s32.totalorder %s28, 0
      %p144 = por %p142, %p143
      %s146 = sadd.s32 %s145, 1
      %p149 = scmp.eq.s32.totalorder %s22, 1
      %p150 = scmp.ne.s32.totalorder %s145, %s147
      %p151 = scmp.eq.s32.totalorder %s22, 0
      %p152 = por %p150, %p151
      %p153 = scmp.ne.s32.totalorder %s145, %s147
      %p154 = scmp.eq.s32.totalorder %s27, 1
      %p155 = por %p153, %p154
      %p156 = scmp.ne.s32.totalorder %s147, %s148
      %p157 = scmp.eq.s32.totalorder %s27, 0
      %p158 = por %p156, %p157
      %p159 = scmp.ne.s32.totalorder %s147, %s148
      %p160 = scmp.eq.s32.totalorder %s28, 1
      %p161 = por %p159, %p160
      %p163 = scmp.ne.s32.totalorder %s148, %s162
      %p164 = scmp.eq.s32.totalorder %s28, 0
      %p165 = por %p163, %p164
      %s167 = sadd.s32 %s166, 1
      %p170 = scmp.eq.s32.totalorder %s22, 1
      %p171 = scmp.ne.s32.totalorder %s166, %s168
      %p172 = scmp.eq.s32.totalorder %s22, 0
      %p173 = por %p171, %p172
      %p174 = scmp.ne.s32.totalorder %s166, %s168
      %p175 = scmp.eq.s32.totalorder %s27, 1
      %p176 = por %p174, %p175
      %p177 = scmp.ne.s32.totalorder %s168, %s169
      %p178 = scmp.eq.s32.totalorder %s27, 0
      %p179 = por %p177, %p178
      %p180 = scmp.ne.s32.totalorder %s168, %s169
      %p181 = scmp.eq.s32.totalorder %s28, 1
      %p182 = por %p180, %p181
      %p184 = scmp.ne.s32.totalorder %s169, %s183
      %p185 = scmp.eq.s32.totalorder %s28, 0
      %p186 = por %p184, %p185
      %s188 = sadd.s32 %s187, 1
      %p191 = scmp.eq.s32.totalorder %s22, 1
      %p192 = scmp.ne.s32.totalorder %s187, %s189
      %p193 = scmp.eq.s32.totalorder %s22, 0
      %p194 = por %p192, %p193
      %p195 = scmp.ne.s32.totalorder %s187, %s189
      %p196 = scmp.eq.s32.totalorder %s27, 1
      %p197 = por %p195, %p196
      %p198 = scmp.ne.s32.totalorder %s189, %s190
      %p199 = scmp.eq.s32.totalorder %s27, 0
      %p200 = por %p198, %p199
      %p201 = scmp.ne.s32.totalorder %s189, %s190
      %p202 = scmp.eq.s32.totalorder %s28, 1
      %p203 = por %p201, %p202
      %p205 = scmp.ne.s32.totalorder %s190, %s204
      %p206 = scmp.eq.s32.totalorder %s28, 0
      %p207 = por %p205, %p206
      %s209 = sadd.s32 %s208, 1
      %p212 = scmp.eq.s32.totalorder %s22, 1
      %p213 = scmp.ne.s32.totalorder %s208, %s210
      %p214 = scmp.eq.s32.totalorder %s22, 0
      %p215 = por %p213, %p214
      %p216 = scmp.ne.s32.totalorder %s208, %s210
      %p217 = scmp.eq.s32.totalorder %s27, 1
      %p218 = por %p216, %p217
      %p219 = scmp.ne.s32.totalorder %s210, %s211
      %p220 = scmp.eq.s32.totalorder %s27, 0
      %p221 = por %p219, %p220
      %p222 = scmp.ne.s32.totalorder %s210, %s211
      %p223 = scmp.eq.s32.totalorder %s28, 1
      %p224 = por %p222, %p223
      %p226 = scmp.ne.s32.totalorder %s211, %s225
      %p227 = scmp.eq.s32.totalorder %s28, 0
      %p228 = por %p226, %p227
      %s230 = sadd.s32 %s229, 1
      %p233 = scmp.eq.s32.totalorder %s22, 1
      %p234 = scmp.ne.s32.totalorder %s229, %s231
      %p235 = scmp.eq.s32.totalorder %s22, 0
      %p236 = por %p234, %p235
      %p237 = scmp.ne.s32.totalorder %s229, %s231
      %p238 = scmp.eq.s32.totalorder %s27, 1
      %p239 = por %p237, %p238
      %p240 = scmp.ne.s32.totalorder %s231, %s232
      %p241 = scmp.eq.s32.totalorder %s27, 0
      %p242 = por %p240, %p241
      %p243 = scmp.ne.s32.totalorder %s231, %s232
      %p244 = scmp.eq.s32.totalorder %s28, 1
      %p245 = por %p243, %p244
      %p247 = scmp.ne.s32.totalorder %s232, %s246
      %p248 = scmp.eq.s32.totalorder %s28, 0
      %p249 = por %p247, %p248
      %s251 = sadd.s32 %s250, 1
      %p254 = scmp.eq.s32.totalorder %s22, 1
      %p255 = scmp.ne.s32.totalorder %s250, %s252
      %p256 = scmp.eq.s32.totalorder %s22, 0
      %p257 = por %p255, %p256
      %p258 = scmp.ne.s32.totalorder %s250, %s252
      %p259 = scmp.eq.s32.totalorder %s27, 1
      %p260 = por %p258, %p259
      %p261 = scmp.ne.s32.totalorder %s252, %s253
      %p262 = scmp.eq.s32.totalorder %s27, 0
      %p263 = por %p261, %p262
      %p264 = scmp.ne.s32.totalorder %s252, %s253
      %p265 = scmp.eq.s32.totalorder %s28, 1
      %p266 = por %p264, %p265
      %p268 = scmp.ne.s32.totalorder %s253, %s267
      %p269 = scmp.eq.s32.totalorder %s28, 0
      %p270 = por %p268, %p269
      %s271 = ssub.s32 %s22, %s29
      %p272 = scmp.eq.s32.totalorder %s271, 0
      %s274 = sadd.s32 %s273, 1
      %s275 = scalar_select %p272, %s273, %s274
      %p278 = pneg %p272
      %p279 = scmp.eq.s32.totalorder %s22, 1
      %p280 = por %p278, %p279
      %p281 = scmp.ne.s32.totalorder %s273, %s276
      %p282 = scmp.eq.s32.totalorder %s22, 0
      %p283 = por %p281, %p282
      %p284 = scmp.ne.s32.totalorder %s273, %s276
      %p285 = scmp.eq.s32.totalorder %s27, 1
      %p286 = por %p284, %p285
      %p287 = scmp.ne.s32.totalorder %s276, %s277
      %p288 = scmp.eq.s32.totalorder %s27, 0
      %p289 = por %p287, %p288
      %p290 = scmp.ne.s32.totalorder %s276, %s277
      %p291 = scmp.eq.s32.totalorder %s28, 1
      %p292 = por %p290, %p291
      %p294 = scmp.ne.s32.totalorder %s277, %s293
      %p295 = scmp.eq.s32.totalorder %s28, 0
      %p296 = por %p294, %p295
      %p297 = scmp.le.s32.totalorder 1, %s22
      %p298 = scmp.lt.s32.totalorder %s22, 3
      %p299 = pnand %p297, %p298
      %p300 = pneg %p299
      // Predicated region
      $region9: #{tpu_custom_call.1} parent=5 // pred_check
        _
      $region10: #{tpu_custom_call.1} parent=5 // pred_check_branch
        %302 = sbr.rel (%p299) target = $region12
      $region11: #{tpu_custom_call.1} parent=5 // pred_region
        %s303 = ssub.s32 %s22, 1
        // Predicated region
        $region13: #{tpu_custom_call.1} parent=11 // pred_check
          %p304 = pneg %p95
        $region14: #{tpu_custom_call.1} parent=11 // pred_check_branch
          %306 = sbr.rel (%p304) target = $region16
        $region15: #{tpu_custom_call.1} parent=11 // pred_region
          _
        $region16: #{tpu_custom_call.1} parent=11 // pred_fallthru
          _
        // Predicated region
        $region17: #{tpu_custom_call.1} parent=11 // pred_check
          %p307 = pneg %p116
        $region18: #{tpu_custom_call.1} parent=11 // pred_check_branch
          %309 = sbr.rel (%p307) target = $region20
        $region19: #{tpu_custom_call.1} parent=11 // pred_region
          _
        $region20: #{tpu_custom_call.1} parent=11 // pred_fallthru
          _
        // Predicated region
        $region21: #{tpu_custom_call.1} parent=11 // pred_check
          %p310 = pneg %p137
        $region22: #{tpu_custom_call.1} parent=11 // pred_check_branch
          %312 = sbr.rel (%p310) target = $region24
        $region23: #{tpu_custom_call.1} parent=11 // pred_region
          _
        $region24: #{tpu_custom_call.1} parent=11 // pred_fallthru
          _
        // Predicated region
        $region25: #{tpu_custom_call.1} parent=11 // pred_check
          %p313 = pneg %p158
        $region26: #{tpu_custom_call.1} parent=11 // pred_check_branch
          %315 = sbr.rel (%p313) target = $region28
        $region27: #{tpu_custom_call.1} parent=11 // pred_region
          _
        $region28: #{tpu_custom_call.1} parent=11 // pred_fallthru
          _
        // Predicated region
        $region29: #{tpu_custom_call.1} parent=11 // pred_check
          %p316 = pneg %p179
        $region30: #{tpu_custom_call.1} parent=11 // pred_check_branch
          %318 = sbr.rel (%p316) target = $region32
        $region31: #{tpu_custom_call.1} parent=11 // pred_region
          _
        $region32: #{tpu_custom_call.1} parent=11 // pred_fallthru
          _
        // Predicated region
        $region33: #{tpu_custom_call.1} parent=11 // pred_check
          %p319 = pneg %p200
        $region34: #{tpu_custom_call.1} parent=11 // pred_check_branch
          %321 = sbr.rel (%p319) target = $region36
        $region35: #{tpu_custom_call.1} parent=11 // pred_region
          _
        $region36: #{tpu_custom_call.1} parent=11 // pred_fallthru
          _
        // Predicated region
        $region37: #{tpu_custom_call.1} parent=11 // pred_check
          %p322 = pneg %p221
        $region38: #{tpu_custom_call.1} parent=11 // pred_check_branch
          %324 = sbr.rel (%p322) target = $region40
        $region39: #{tpu_custom_call.1} parent=11 // pred_region
          _
        $region40: #{tpu_custom_call.1} parent=11 // pred_fallthru
          _
        // Predicated region
        $region41: #{tpu_custom_call.1} parent=11 // pred_check
          %p325 = pneg %p242
        $region42: #{tpu_custom_call.1} parent=11 // pred_check_branch
          %327 = sbr.rel (%p325) target = $region44
        $region43: #{tpu_custom_call.1} parent=11 // pred_region
          _
        $region44: #{tpu_custom_call.1} parent=11 // pred_fallthru
          _
        // Predicated region
        $region45: #{tpu_custom_call.1} parent=11 // pred_check
          %p328 = pneg %p263
        $region46: #{tpu_custom_call.1} parent=11 // pred_check_branch
          %330 = sbr.rel (%p328) target = $region48
        $region47: #{tpu_custom_call.1} parent=11 // pred_region
          _
        $region48: #{tpu_custom_call.1} parent=11 // pred_fallthru
          _
      $region12: #{tpu_custom_call.1} parent=5 // pred_fallthru
        _
      %p331 = scmp.lt.s32.totalorder %s22, 2
      // Predicated region
      $region49: #{tpu_custom_call.1} parent=5 // pred_check
        %p332 = pneg %p331
      $region50: #{tpu_custom_call.1} parent=5 // pred_check_branch
        %334 = sbr.rel (%p332) target = $region52
      $region51: #{tpu_custom_call.1} parent=5 // pred_region
        // Predicated region
        $region53: #{tpu_custom_call.1} parent=51 // pred_check
          %p335 = pneg %p42
        $region54: #{tpu_custom_call.1} parent=51 // pred_check_branch
          %337 = sbr.rel (%p335) target = $region56
        $region55: #{tpu_custom_call.1} parent=51 // pred_region
          %s338 = smul.u32 32, %s22
          %s339 = ssub.s32 38, %s338
          %p340 = scmp.lt.s32.totalorder %s339, 32
          %s341 = scalar_select %p340, %s339, 32
          %s342 = smul.u32 128, %s341
          %p343 = scmp.lt.s32.totalorder %s338, 37
          %s344 = scalar_select %p343, %s338, 37
          %s345 = smul.addr %s344, 8
          %s346 = scalar_lea.vmem %s0, %s345
          %s347 = smul.u32 32, %s22
          %s348 = ssub.s32 38, %s347
          %p349 = scmp.lt.s32.totalorder %s348, 32
          %s350 = scalar_select %p349, %s348, 32
          %s351 = smul.u32 128, %s350
        $region56: #{tpu_custom_call.1} parent=51 // pred_fallthru
          _
        // Predicated region
        $region57: #{tpu_custom_call.1} parent=51 // pred_check
          %p352 = pneg %p68
        $region58: #{tpu_custom_call.1} parent=51 // pred_check_branch
          %354 = sbr.rel (%p352) target = $region60
        $region59: #{tpu_custom_call.1} parent=51 // pred_region
          %s355 = smul.u32 32, %s22
          %s356 = ssub.s32 38, %s355
          %p357 = scmp.lt.s32.totalorder %s356, 32
          %s358 = scalar_select %p357, %s356, 32
          %s359 = smul.u32 128, %s358
          %p360 = scmp.lt.s32.totalorder %s355, 37
          %s361 = scalar_select %p360, %s355, 37
          %s362 = smul.addr %s361, 8
          %s363 = scalar_lea.vmem %s1, %s362
          %s364 = smul.u32 32, %s22
          %s365 = ssub.s32 38, %s364
          %p366 = scmp.lt.s32.totalorder %s365, 32
          %s367 = scalar_select %p366, %s365, 32
          %s368 = smul.u32 128, %s367
        $region60: #{tpu_custom_call.1} parent=51 // pred_fallthru
          _
      $region52: #{tpu_custom_call.1} parent=5 // pred_fallthru
        _
      %p369 = scmp.le.s32.totalorder 1, %s22
      %p370 = scmp.lt.s32.totalorder %s22, 3
      %p371 = pnand %p369, %p370
      %p372 = pneg %p371
      // Predicated region
      $region61: #{tpu_custom_call.1} parent=5 // pred_check
        _
      $region62: #{tpu_custom_call.1} parent=5 // pred_check_branch
        %374 = sbr.rel (%p371) target = $region64
      $region63: #{tpu_custom_call.1} parent=5 // pred_region
        %s375 = ssub.s32 %s22, 1
        %s376 = smul.u32 32, %s27
        %s377 = ssub.s32 38, %s376
        %p378 = scmp.lt.s32.totalorder %s377, 32
        %s379 = scalar_select %p378, %s377, 32
        %s380 = smul.u32 128, %s379
        %p381 = scmp.lt.s32.totalorder %s376, 37
        %s382 = scalar_select %p381, %s376, 37
        %s383 = smul.addr %s382, 8
        %s384 = scalar_lea.vmem %s0, %s383
        %p385 = pneg %p48
        %p386 = pneg %p45
        %s387 = smul.u32 32, %s27
        %s388 = ssub.s32 38, %s387
        %p389 = scmp.lt.s32.totalorder %s388, 32
        %s390 = scalar_select %p389, %s388, 32
        %s391 = smul.u32 128, %s390
        %p392 = scmp.lt.s32.totalorder %s387, 37
        %s393 = scalar_select %p392, %s387, 37
        %s394 = smul.addr %s393, 8
        %s395 = scalar_lea.vmem %s1, %s394
        %p396 = pneg %p74
        %p397 = pneg %p71
        %p398 = pneg %p95
        %p399 = pneg %p92
        %p400 = pneg %p116
        %p401 = pneg %p113
        %p402 = pneg %p137
        %p403 = pneg %p134
        %p404 = pneg %p158
        %p405 = pneg %p155
        %p406 = pneg %p179
        %p407 = pneg %p176
        %p408 = pneg %p200
        %p409 = pneg %p197
        %p410 = pneg %p221
        %p411 = pneg %p218
        %p412 = pneg %p242
        %p413 = pneg %p239
        %p414 = pneg %p263
        %p415 = pneg %p260
        %p416 = pneg %p289
        %p417 = pneg %p286
        %s418 = sand.u32 %s276, 1
        %s419 = scalar_lea.sflag [#allocation4], %s418
        %s420 = sand.u32 %s276, 1
        %s421 = smul.addr %s420, 2
        %s422 = scalar_lea.vmem [#allocation3], %s421
        %s423 = smul.u32 32, %s27
        %s424 = ssub.s32 38, %s423
        %p425 = scmp.lt.s32.totalorder %s424, 32
        %s426 = scalar_select %p425, %s424, 32
        %s427 = smul.u32 128, %s426
        %p428 = scmp.lt.s32.totalorder %s423, 37
        %s429 = scalar_select %p428, %s423, 37
        %s430 = smul.addr %s429, 8
        %s431 = scalar_lea.vmem %s0, %s430
        %s432 = smul.u32 32, %s27
        %s433 = ssub.s32 38, %s432
        %p434 = scmp.lt.s32.totalorder %s433, 32
        %s435 = scalar_select %p434, %s433, 32
        %s436 = smul.u32 128, %s435
        %s437 = smul.u32 32, %s27
        %s438 = ssub.s32 38, %s437
        %p439 = scmp.lt.s32.totalorder %s438, 32
        %s440 = scalar_select %p439, %s438, 32
        %s441 = smul.u32 128, %s440
        %p442 = scmp.lt.s32.totalorder %s437, 37
        %s443 = scalar_select %p442, %s437, 37
        %s444 = smul.addr %s443, 8
        %s445 = scalar_lea.vmem %s1, %s444
        %s446 = smul.u32 32, %s27
        %s447 = ssub.s32 38, %s446
        %p448 = scmp.lt.s32.totalorder %s447, 32
        %s449 = scalar_select %p448, %s447, 32
        %s450 = smul.u32 128, %s449
        %s451 = smul.u32 2, %s27
        %s452 = ssub.s32 3, %s451
        %p453 = scmp.lt.s32.totalorder %s452, 2
        %s454 = scalar_select %p453, %s452, 2
        %s455 = smul.u32 16, %s454
        %v457 = vld [vmem:[%s431] sm:$0xff]
        %v458 = vld [vmem:[%s431 + $0x8] sm:$0xff]
        %v459 = vld [vmem:[%s431 + $0x10] sm:$0xff]
        %v460 = vld [vmem:[%s431 + $0x18] sm:$0xff]
        %v461 = vld [vmem:[%s431 + $0x20] sm:$0xff]
        %v462 = vld [vmem:[%s431 + $0x28] sm:$0xff]
        %v463 = vld [vmem:[%s431 + $0x30] sm:$0xff]
        %v464 = vld [vmem:[%s431 + $0x38] sm:$0xff]
        %v465 = vld [vmem:[%s431 + $0x40] sm:$0xff]
        %v466 = vld [vmem:[%s431 + $0x48] sm:$0xff]
        %v467 = vld [vmem:[%s431 + $0x50] sm:$0xff]
        %v468 = vld [vmem:[%s431 + $0x58] sm:$0xff]
        %v469 = vld [vmem:[%s431 + $0x60] sm:$0xff]
        %v470 = vld [vmem:[%s431 + $0x68] sm:$0xff]
        %v471 = vld [vmem:[%s431 + $0x70] sm:$0xff]
        %v472 = vld [vmem:[%s431 + $0x78] sm:$0xff]
        %v473 = vld [vmem:[%s431 + $0x80] sm:$0xff]
        %v474 = vld [vmem:[%s431 + $0x88] sm:$0xff]
        %v475 = vld [vmem:[%s431 + $0x90] sm:$0xff]
        %v476 = vld [vmem:[%s431 + $0x98] sm:$0xff]
        %v477 = vld [vmem:[%s431 + $0xa0] sm:$0xff]
        %v478 = vld [vmem:[%s431 + $0xa8] sm:$0xff]
        %v479 = vld [vmem:[%s431 + $0xb0] sm:$0xff]
        %v480 = vld [vmem:[%s431 + $0xb8] sm:$0xff]
        %v481 = vld [vmem:[%s431 + $0xc0] sm:$0xff]
        %v482 = vld [vmem:[%s431 + $0xc8] sm:$0xff]
        %v483 = vld [vmem:[%s431 + $0xd0] sm:$0xff]
        %v484 = vld [vmem:[%s431 + $0xd8] sm:$0xff]
        %v485 = vld [vmem:[%s431 + $0xe0] sm:$0xff]
        %v486 = vld [vmem:[%s431 + $0xe8] sm:$0xff]
        %v487 = vld [vmem:[%s431 + $0xf0] sm:$0xff]
        %v488 = vld [vmem:[%s431 + $0xf8] sm:$0xff]
        %v489 = vpack.c.bf16 %v458, %v457
        %v490 = vpack.c.bf16 %v460, %v459
        %v491 = vpack.c.bf16 %v462, %v461
        %v492 = vpack.c.bf16 %v464, %v463
        %v493 = vpack.c.bf16 %v466, %v465
        %v494 = vpack.c.bf16 %v468, %v467
        %v495 = vpack.c.bf16 %v470, %v469
        %v496 = vpack.c.bf16 %v472, %v471
        %v497 = vpack.c.bf16 %v474, %v473
        %v498 = vpack.c.bf16 %v476, %v475
        %v499 = vpack.c.bf16 %v478, %v477
        %v500 = vpack.c.bf16 %v480, %v479
        %v501 = vpack.c.bf16 %v482, %v481
        %v502 = vpack.c.bf16 %v484, %v483
        %v503 = vpack.c.bf16 %v486, %v485
        %v504 = vpack.c.bf16 %v488, %v487
        %v505 = vld [vmem:[%s445] sm:$0xff]
        %v506 = vld [vmem:[%s445 + $0x8] sm:$0xff]
        %v507 = vld [vmem:[%s445 + $0x10] sm:$0xff]
        %v508 = vld [vmem:[%s445 + $0x18] sm:$0xff]
        %v509 = vld [vmem:[%s445 + $0x20] sm:$0xff]
        %v510 = vld [vmem:[%s445 + $0x28] sm:$0xff]
        %v511 = vld [vmem:[%s445 + $0x30] sm:$0xff]
        %v512 = vld [vmem:[%s445 + $0x38] sm:$0xff]
        %v513 = vld [vmem:[%s445 + $0x40] sm:$0xff]
        %v514 = vld [vmem:[%s445 + $0x48] sm:$0xff]
        %v515 = vld [vmem:[%s445 + $0x50] sm:$0xff]
        %v516 = vld [vmem:[%s445 + $0x58] sm:$0xff]
        %v517 = vld [vmem:[%s445 + $0x60] sm:$0xff]
        %v518 = vld [vmem:[%s445 + $0x68] sm:$0xff]
        %v519 = vld [vmem:[%s445 + $0x70] sm:$0xff]
        %v520 = vld [vmem:[%s445 + $0x78] sm:$0xff]
        %v521 = vld [vmem:[%s445 + $0x80] sm:$0xff]
        %v522 = vld [vmem:[%s445 + $0x88] sm:$0xff]
        %v523 = vld [vmem:[%s445 + $0x90] sm:$0xff]
        %v524 = vld [vmem:[%s445 + $0x98] sm:$0xff]
        %v525 = vld [vmem:[%s445 + $0xa0] sm:$0xff]
        %v526 = vld [vmem:[%s445 + $0xa8] sm:$0xff]
        %v527 = vld [vmem:[%s445 + $0xb0] sm:$0xff]
        %v528 = vld [vmem:[%s445 + $0xb8] sm:$0xff]
        %v529 = vld [vmem:[%s445 + $0xc0] sm:$0xff]
        %v530 = vld [vmem:[%s445 + $0xc8] sm:$0xff]
        %v531 = vld [vmem:[%s445 + $0xd0] sm:$0xff]
        %v532 = vld [vmem:[%s445 + $0xd8] sm:$0xff]
        %v533 = vld [vmem:[%s445 + $0xe0] sm:$0xff]
        %v534 = vld [vmem:[%s445 + $0xe8] sm:$0xff]
        %v535 = vld [vmem:[%s445 + $0xf0] sm:$0xff]
        %v536 = vld [vmem:[%s445 + $0xf8] sm:$0xff]
        %v537 = vpack.c.bf16 %v506, %v505
        %v538 = vpack.c.bf16 %v508, %v507
        %v539 = vpack.c.bf16 %v510, %v509
        %v540 = vpack.c.bf16 %v512, %v511
        %v541 = vpack.c.bf16 %v514, %v513
        %v542 = vpack.c.bf16 %v516, %v515
        %v543 = vpack.c.bf16 %v518, %v517
        %v544 = vpack.c.bf16 %v520, %v519
        %v545 = vpack.c.bf16 %v522, %v521
        %v546 = vpack.c.bf16 %v524, %v523
        %v547 = vpack.c.bf16 %v526, %v525
        %v548 = vpack.c.bf16 %v528, %v527
        %v549 = vpack.c.bf16 %v530, %v529
        %v550 = vpack.c.bf16 %v532, %v531
        %v551 = vpack.c.bf16 %v534, %v533
        %v552 = vpack.c.bf16 %v536, %v535
        %v553 = vld [vmem:[%s2] sm:$0xf]
        %v554 = vld [vmem:[%s2 + $0x4] sm:$0xf]
        %v555 = vld [vmem:[%s2 + $0x8] sm:$0xf]
        %v556 = vld [vmem:[%s2 + $0xc] sm:$0xf]
        %v557 = vld [vmem:[%s2 + $0x10] sm:$0xf]
        %v558 = vld [vmem:[%s2 + $0x14] sm:$0xf]
        %v559 = vld [vmem:[%s2 + $0x18] sm:$0xf]
        %v560 = vld [vmem:[%s2 + $0x1c] sm:$0xf]
        %v561 = vld [vmem:[%s3] sm:$0xff]
        %v562 = vld [vmem:[%s3 + $0x8] sm:$0xff]
        %v563 = vld [vmem:[%s3 + $0x10] sm:$0xff]
        %v564 = vld [vmem:[%s3 + $0x18] sm:$0xff]
        %v565 = vld [vmem:[%s3 + $0x20] sm:$0xff]
        %v566 = vld [vmem:[%s3 + $0x28] sm:$0xff]
        %v567 = vld [vmem:[%s3 + $0x30] sm:$0xff]
        %v568 = vld [vmem:[%s3 + $0x38] sm:$0xff]
        %570 = vset.pattern.permute.xlu0 0
        %571 = vperm.xlu0 %570, %v561
        %v572 = vpop.permute.xlu0 %571
        %575 = vset.pattern.permute.xlu0 0
        %576 = vperm.xlu0 %575, %v562
        %v577 = vpop.permute.xlu0 %576
        %580 = vset.pattern.permute.xlu0 0
        %581 = vperm.xlu0 %580, %v563
        %v582 = vpop.permute.xlu0 %581
        %585 = vset.pattern.permute.xlu0 0
        %586 = vperm.xlu0 %585, %v564
        %v587 = vpop.permute.xlu0 %586
        %590 = vset.pattern.permute.xlu0 0
        %591 = vperm.xlu0 %590, %v565
        %v592 = vpop.permute.xlu0 %591
        %595 = vset.pattern.permute.xlu0 0
        %596 = vperm.xlu0 %595, %v566
        %v597 = vpop.permute.xlu0 %596
        %600 = vset.pattern.permute.xlu0 0
        %601 = vperm.xlu0 %600, %v567
        %v602 = vpop.permute.xlu0 %601
        %605 = vset.pattern.permute.xlu0 0
        %606 = vperm.xlu0 %605, %v568
        %v607 = vpop.permute.xlu0 %606
        %v617 = vunpack.c.l.b16 %v553
        %v618 = vunpack.c.l.b16 %v554
        %v619 = vunpack.c.l.b16 %v555
        %v620 = vunpack.c.l.b16 %v556
        %v621 = vunpack.c.l.b16 %v557
        %v622 = vunpack.c.l.b16 %v558
        %v623 = vunpack.c.l.b16 %v559
        %v624 = vunpack.c.l.b16 %v560
        %v625 = vpack.c.b16 %v618, %v617
        %v626 = vpack.c.b16 %v620, %v619
        %v627 = vpack.c.b16 %v622, %v621
        %v628 = vpack.c.b16 %v624, %v623
        %vm629 = vcmask 269312
        %v631 = vsel %vm629, %v625, 0
        %v634 = vsel %vm629, %v626, 0
        %v637 = vsel %vm629, %v627, 0
        %v640 = vsel %vm629, %v628, 0
        %v643 = vsel %vm629, %v489, 0
        %v646 = vsel %vm629, %v490, 0
        %v649 = vsel %vm629, %v491, 0
        %v652 = vsel %vm629, %v492, 0
        %v655 = vsel %vm629, %v493, 0
        %v658 = vsel %vm629, %v494, 0
        %v661 = vsel %vm629, %v495, 0
        %v664 = vsel %vm629, %v496, 0
        %v667 = vsel %vm629, %v497, 0
        %v670 = vsel %vm629, %v498, 0
        %v673 = vsel %vm629, %v499, 0
        %v676 = vsel %vm629, %v500, 0
        %v679 = vsel %vm629, %v501, 0
        %v682 = vsel %vm629, %v502, 0
        %v685 = vsel %vm629, %v503, 0
        %v688 = vsel %vm629, %v504, 0
        %690 = vmatprep.subr.bf16.mxu0 0
        %691 = vmatpush1.bf16.xpose.msra.mxu0 %v664
        %692 = vmatprep.subr.bf16.mxu0 0
        %693 = vmatpush1.bf16.xpose.msra.mxu0 %v661
        %694 = vmatprep.subr.bf16.mxu0 0
        %695 = vmatpush1.bf16.xpose.msra.mxu0 %v658
        %696 = vmatprep.subr.bf16.mxu0 0
        %697 = vmatpush1.bf16.xpose.msra.mxu0 %v655
        %698 = vmatprep.subr.bf16.mxu0 0
        %699 = vmatpush1.bf16.xpose.msra.mxu0 %v652
        %700 = vmatprep.subr.bf16.mxu0 0
        %701 = vmatpush1.bf16.xpose.msra.mxu0 %v649
        %702 = vmatprep.subr.bf16.mxu0 0
        %703 = vmatpush1.bf16.xpose.msra.mxu0 %v646
        %704 = vmatprep.subr.bf16.mxu0 0
        %705 = vmatpush1.bf16.xpose.msra.mxu0 %v643
        %706 = vmatprep.subr.bf16.mxu0 0
        %707 = vmatpush2.bf16.xpose.msra.mxu0 %v688
        %708 = vmatprep.subr.bf16.mxu0 0
        %709 = vmatpush2.bf16.xpose.msra.mxu0 %v685
        %710 = vmatprep.subr.bf16.mxu0 0
        %711 = vmatpush2.bf16.xpose.msra.mxu0 %v682
        %712 = vmatprep.subr.bf16.mxu0 0
        %713 = vmatpush2.bf16.xpose.msra.mxu0 %v679
        %714 = vmatprep.subr.bf16.mxu0 0
        %715 = vmatpush2.bf16.xpose.msra.mxu0 %v676
        %716 = vmatprep.subr.bf16.mxu0 0
        %717 = vmatpush2.bf16.xpose.msra.mxu0 %v673
        %718 = vmatprep.subr.bf16.mxu0 0
        %719 = vmatpush2.bf16.xpose.msra.mxu0 %v670
        %720 = vmatprep.subr.bf16.mxu0 0
        %721 = vmatpush2.bf16.xpose.msra.mxu0 %v667
        %722 = vmatprep.mubr.bf16.mxu0 0
        %723 = vmatmul.mubr.bf16.gmra.mxu0 %v631
        %v724 = vpop.f32.mrf.mxu0
        %v725 = vadd.f32 %v572, %v724
        %v726 = vpop.f32.mrf.mxu0
        %v727 = vadd.f32 %v572, %v726
        %v728 = vpop.f32.mrf.mxu0
        %v729 = vadd.f32 %v577, %v728
        %v730 = vpop.f32.mrf.mxu0
        %v731 = vadd.f32 %v577, %v730
        %732 = vmatprep.mubr.bf16.mxu0 0
        %733 = vmatmul.mubr.bf16.gmra.mxu0 %v634
        %v734 = vpop.f32.mrf.mxu0
        %v735 = vadd.f32 %v582, %v734
        %v736 = vpop.f32.mrf.mxu0
        %v737 = vadd.f32 %v582, %v736
        %v738 = vpop.f32.mrf.mxu0
        %v739 = vadd.f32 %v587, %v738
        %v740 = vpop.f32.mrf.mxu0
        %v741 = vadd.f32 %v587, %v740
        %742 = vmatprep.mubr.bf16.mxu0 0
        %743 = vmatmul.mubr.bf16.gmra.mxu0 %v637
        %v744 = vpop.f32.mrf.mxu0
        %v745 = vadd.f32 %v592, %v744
        %v746 = vpop.f32.mrf.mxu0
        %v747 = vadd.f32 %v592, %v746
        %v748 = vpop.f32.mrf.mxu0
        %v749 = vadd.f32 %v597, %v748
        %v750 = vpop.f32.mrf.mxu0
        %v751 = vadd.f32 %v597, %v750
        %752 = vmatprep.mubr.bf16.mxu0 0
        %753 = vmatmul.mubr.bf16.gmra.mxu0 %v640
        %v754 = vpop.f32.mrf.mxu0
        %v755 = vadd.f32 %v602, %v754
        %v756 = vpop.f32.mrf.mxu0
        %v757 = vadd.f32 %v602, %v756
        %v758 = vpop.f32.mrf.mxu0
        %v759 = vadd.f32 %v607, %v758
        %v760 = vpop.f32.mrf.mxu0
        %v761 = vadd.f32 %v607, %v760
        %762 = vdwg.mxu0
        %v763 = vmax.f32 %v725, 0.0
        %v764 = vmax.f32 %v727, 0.0
        %v765 = vmax.f32 %v729, 0.0
        %v766 = vmax.f32 %v731, 0.0
        %v767 = vmax.f32 %v735, 0.0
        %v768 = vmax.f32 %v737, 0.0
        %v769 = vmax.f32 %v739, 0.0
        %v770 = vmax.f32 %v741, 0.0
        %v771 = vmax.f32 %v745, 0.0
        %v772 = vmax.f32 %v747, 0.0
        %v773 = vmax.f32 %v749, 0.0
        %v774 = vmax.f32 %v751, 0.0
        %v775 = vmax.f32 %v755, 0.0
        %v776 = vmax.f32 %v757, 0.0
        %v777 = vmax.f32 %v759, 0.0
        %v778 = vmax.f32 %v761, 0.0
        %v779 = vld [vmem:[%s4] sm:$0xf]
        %v780 = vld [vmem:[%s4 + $0x4] sm:$0xf]
        %v781 = vld [vmem:[%s4 + $0x8] sm:$0xf]
        %v782 = vld [vmem:[%s4 + $0xc] sm:$0xf]
        %v783 = vpack.c.bf16 %v765, %v763
        %v784 = vpack.c.bf16 %v766, %v764
        %v785 = vpack.c.bf16 %v769, %v767
        %v786 = vpack.c.bf16 %v770, %v768
        %v787 = vpack.c.bf16 %v773, %v771
        %v788 = vpack.c.bf16 %v774, %v772
        %v789 = vpack.c.bf16 %v777, %v775
        %v790 = vpack.c.bf16 %v778, %v776
        %v791 = vld [vmem:[%s5] sm:$0xf]
        %v792 = vld [vmem:[%s5 + $0x4] sm:$0xf]
        %v793 = vld [vmem:[%s5 + $0x8] sm:$0xf]
        %v794 = vld [vmem:[%s5 + $0xc] sm:$0xf]
        %v799 = vunpack.c.l.b16 %v791
        %v800 = vunpack.c.l.b16 %v792
        %v801 = vunpack.c.l.b16 %v793
        %v802 = vunpack.c.l.b16 %v794
        %v803 = vpack.c.b16 %v800, %v799
        %v804 = vpack.c.b16 %v802, %v801
        %vm805 = vcmask 31744
        %v807 = vsel %vm805, %v803, 0
        %v810 = vsel %vm805, %v804, 0
        %v813 = vsel %vm805, %v537, 0
        %v816 = vsel %vm805, %v538, 0
        %v819 = vsel %vm805, %v539, 0
        %v822 = vsel %vm805, %v540, 0
        %v825 = vsel %vm805, %v541, 0
        %v828 = vsel %vm805, %v542, 0
        %v831 = vsel %vm805, %v543, 0
        %v834 = vsel %vm805, %v544, 0
        %v837 = vsel %vm805, %v545, 0
        %v840 = vsel %vm805, %v546, 0
        %v843 = vsel %vm805, %v547, 0
        %v846 = vsel %vm805, %v548, 0
        %v849 = vsel %vm805, %v549, 0
        %v852 = vsel %vm805, %v550, 0
        %v855 = vsel %vm805, %v551, 0
        %v858 = vsel %vm805, %v552, 0
        %860 = vmatprep.subr.bf16.mxu0 0
        %861 = vmatpush1.bf16.xpose.msra.mxu0 %v834
        %862 = vmatprep.subr.bf16.mxu0 0
        %863 = vmatpush1.bf16.xpose.msra.mxu0 %v831
        %864 = vmatprep.subr.bf16.mxu0 0
        %865 = vmatpush1.bf16.xpose.msra.mxu0 %v828
        %866 = vmatprep.subr.bf16.mxu0 0
        %867 = vmatpush1.bf16.xpose.msra.mxu0 %v825
        %868 = vmatprep.subr.bf16.mxu0 0
        %869 = vmatpush1.bf16.xpose.msra.mxu0 %v822
        %870 = vmatprep.subr.bf16.mxu0 0
        %871 = vmatpush1.bf16.xpose.msra.mxu0 %v819
        %872 = vmatprep.subr.bf16.mxu0 0
        %873 = vmatpush1.bf16.xpose.msra.mxu0 %v816
        %874 = vmatprep.subr.bf16.mxu0 0
        %875 = vmatpush1.bf16.xpose.msra.mxu0 %v813
        %876 = vmatprep.subr.bf16.mxu0 0
        %877 = vmatpush2.bf16.xpose.msra.mxu0 %v858
        %878 = vmatprep.subr.bf16.mxu0 0
        %879 = vmatpush2.bf16.xpose.msra.mxu0 %v855
        %880 = vmatprep.subr.bf16.mxu0 0
        %881 = vmatpush2.bf16.xpose.msra.mxu0 %v852
        %882 = vmatprep.subr.bf16.mxu0 0
        %883 = vmatpush2.bf16.xpose.msra.mxu0 %v849
        %884 = vmatprep.subr.bf16.mxu0 0
        %885 = vmatpush2.bf16.xpose.msra.mxu0 %v846
        %886 = vmatprep.subr.bf16.mxu0 0
        %887 = vmatpush2.bf16.xpose.msra.mxu0 %v843
        %888 = vmatprep.subr.bf16.mxu0 0
        %889 = vmatpush2.bf16.xpose.msra.mxu0 %v840
        %890 = vmatprep.subr.bf16.mxu0 0
        %891 = vmatpush2.bf16.xpose.msra.mxu0 %v837
        %892 = vmatprep.mubr.bf16.mxu0 0
        %893 = vmatmul.mubr.bf16.gmra.mxu0 %v807
        %v894 = vpop.f32.mrf.mxu0
        %v895 = vadd.f32 0.0, %v894
        %v896 = vpop.f32.mrf.mxu0
        %v897 = vadd.f32 0.0, %v896
        %v898 = vpop.f32.mrf.mxu0
        %v899 = vadd.f32 0.0, %v898
        %v900 = vpop.f32.mrf.mxu0
        %v901 = vadd.f32 0.0, %v900
        %902 = vmatprep.mubr.bf16.mxu0 0
        %903 = vmatmul.mubr.bf16.gmra.mxu0 %v810
        %v904 = vpop.f32.mrf.mxu0
        %v905 = vadd.f32 0.0, %v904
        %v906 = vpop.f32.mrf.mxu0
        %v907 = vadd.f32 0.0, %v906
        %v908 = vpop.f32.mrf.mxu0
        %v909 = vadd.f32 0.0, %v908
        %v910 = vpop.f32.mrf.mxu0
        %v911 = vadd.f32 0.0, %v910
        %912 = vdwg.mxu0
        %v917 = vunpack.c.l.b16 %v779
        %v918 = vunpack.c.l.b16 %v780
        %v919 = vunpack.c.l.b16 %v781
        %v920 = vunpack.c.l.b16 %v782
        %v921 = vpack.c.b16 %v918, %v917
        %v922 = vpack.c.b16 %v920, %v919
        %vm923 = vcmask 523264
        %v925 = vsel %vm923, %v921, 0
        %v928 = vsel %vm923, %v922, 0
        %930 = vmatprep.subr.bf16.mxu0 0
        %931 = vmatpush1.bf16.msra.mxu0 0
        %932 = vmatprep.subr.bf16.mxu0 0
        %933 = vmatpush1.bf16.msra.mxu0 0
        %934 = vmatprep.subr.bf16.mxu0 0
        %935 = vmatpush1.bf16.msra.mxu0 0
        %936 = vmatprep.subr.bf16.mxu0 0
        %937 = vmatpush1.bf16.msra.mxu0 0
        %938 = vmatprep.subr.bf16.mxu0 %v790
        %939 = vmatpush1.bf16.msra.mxu0 %v789
        %940 = vmatprep.subr.bf16.mxu0 %v788
        %941 = vmatpush1.bf16.msra.mxu0 %v787
        %942 = vmatprep.subr.bf16.mxu0 %v786
        %943 = vmatpush1.bf16.msra.mxu0 %v785
        %944 = vmatprep.subr.bf16.mxu0 %v784
        %945 = vmatpush1.bf16.msra.mxu0 %v783
        %946 = vmatprep.subr.bf16.mxu0 0
        %947 = vmatpush2.bf16.msra.mxu0 0
        %948 = vmatprep.subr.bf16.mxu0 0
        %949 = vmatpush2.bf16.msra.mxu0 0
        %950 = vmatprep.subr.bf16.mxu0 0
        %951 = vmatpush2.bf16.msra.mxu0 0
        %952 = vmatprep.subr.bf16.mxu0 0
        %953 = vmatpush2.bf16.msra.mxu0 0
        %954 = vmatprep.subr.bf16.mxu0 0
        %955 = vmatpush2.bf16.msra.mxu0 0
        %956 = vmatprep.subr.bf16.mxu0 0
        %957 = vmatpush2.bf16.msra.mxu0 0
        %958 = vmatprep.subr.bf16.mxu0 0
        %959 = vmatpush2.bf16.msra.mxu0 0
        %960 = vmatprep.subr.bf16.mxu0 0
        %961 = vmatpush2.bf16.msra.mxu0 0
        %962 = vmatprep.mubr.bf16.mxu0 0
        %963 = vmatmul.mubr.bf16.gmra.mxu0 %v925
        %v964 = vpop.f32.mrf.mxu0
        %v965 = vadd.f32 %v895, %v964
        %v966 = vpop.f32.mrf.mxu0
        %v967 = vadd.f32 %v897, %v966
        %v968 = vpop.f32.mrf.mxu0
        %v969 = vadd.f32 %v899, %v968
        %v970 = vpop.f32.mrf.mxu0
        %v971 = vadd.f32 %v901, %v970
        %972 = vmatprep.mubr.bf16.mxu0 0
        %973 = vmatmul.mubr.bf16.gmra.mxu0 %v928
        %v974 = vpop.f32.mrf.mxu0
        %v975 = vadd.f32 %v905, %v974
        %v976 = vpop.f32.mrf.mxu0
        %v977 = vadd.f32 %v907, %v976
        %v978 = vpop.f32.mrf.mxu0
        %v979 = vadd.f32 %v909, %v978
        %v980 = vpop.f32.mrf.mxu0
        %v981 = vadd.f32 %v911, %v980
        %982 = vdwg.mxu0
        %v983 = vld [vmem:[%s6] sm:$0xff]
        %v984 = vld [vmem:[%s6 + $0x8] sm:$0xff]
        %v985 = vld [vmem:[%s6 + $0x10] sm:$0xff]
        %v986 = vld [vmem:[%s6 + $0x18] sm:$0xff]
        %988 = vset.pattern.permute.xlu0 0
        %989 = vperm.xlu0 %988, %v983
        %v990 = vpop.permute.xlu0 %989
        %993 = vset.pattern.permute.xlu0 0
        %994 = vperm.xlu0 %993, %v984
        %v995 = vpop.permute.xlu0 %994
        %998 = vset.pattern.permute.xlu0 0
        %999 = vperm.xlu0 %998, %v985
        %v1000 = vpop.permute.xlu0 %999
        %1003 = vset.pattern.permute.xlu0 0
        %1004 = vperm.xlu0 %1003, %v986
        %v1005 = vpop.permute.xlu0 %1004
        %v1007 = vadd.f32 %v965, %v990
        %v1008 = vadd.f32 %v967, %v990
        %v1009 = vadd.f32 %v969, %v995
        %v1010 = vadd.f32 %v971, %v995
        %v1011 = vadd.f32 %v975, %v1000
        %v1012 = vadd.f32 %v977, %v1000
        %v1013 = vadd.f32 %v979, %v1005
        %v1014 = vadd.f32 %v981, %v1005
        %v1015 = vmax.f32 %v1007, 0.0
        %v1016 = vmax.f32 %v1008, 0.0
        %v1017 = vmax.f32 %v1009, 0.0
        %v1018 = vmax.f32 %v1010, 0.0
        %v1019 = vmax.f32 %v1011, 0.0
        %v1020 = vmax.f32 %v1012, 0.0
        %v1021 = vmax.f32 %v1013, 0.0
        %v1022 = vmax.f32 %v1014, 0.0
        %v1023 = vld [vmem:[%s7] sm:$0xf]
        %v1024 = vld [vmem:[%s7 + $0x4] sm:$0xf]
        %v1025 = vld [vmem:[%s7 + $0x8] sm:$0xf]
        %v1026 = vld [vmem:[%s7 + $0xc] sm:$0xf]
        %v1027 = vpack.c.bf16 %v1017, %v1015
        %v1028 = vpack.c.bf16 %v1018, %v1016
        %v1029 = vpack.c.bf16 %v1021, %v1019
        %v1030 = vpack.c.bf16 %v1022, %v1020
        %v1031 = vld [vmem:[%s8] sm:$0xff]
        %v1032 = vld [vmem:[%s8 + $0x8] sm:$0xff]
        %v1033 = vld [vmem:[%s8 + $0x10] sm:$0xff]
        %v1034 = vld [vmem:[%s8 + $0x18] sm:$0xff]
        %1036 = vset.pattern.permute.xlu0 0
        %1037 = vperm.xlu0 %1036, %v1031
        %v1038 = vpop.permute.xlu0 %1037
        %1041 = vset.pattern.permute.xlu0 0
        %1042 = vperm.xlu0 %1041, %v1032
        %v1043 = vpop.permute.xlu0 %1042
        %1046 = vset.pattern.permute.xlu0 0
        %1047 = vperm.xlu0 %1046, %v1033
        %v1048 = vpop.permute.xlu0 %1047
        %1051 = vset.pattern.permute.xlu0 0
        %1052 = vperm.xlu0 %1051, %v1034
        %v1053 = vpop.permute.xlu0 %1052
        %v1059 = vunpack.c.l.b16 %v1023
        %v1060 = vunpack.c.l.b16 %v1024
        %v1061 = vunpack.c.l.b16 %v1025
        %v1062 = vunpack.c.l.b16 %v1026
        %v1063 = vpack.c.b16 %v1060, %v1059
        %v1064 = vpack.c.b16 %v1062, %v1061
        %vm1065 = vcmask 261120
        %v1067 = vsel %vm1065, %v1063, 0
        %v1070 = vsel %vm1065, %v1064, 0
        %1072 = vmatprep.subr.bf16.mxu0 0
        %1073 = vmatpush1.bf16.msra.mxu0 0
        %1074 = vmatprep.subr.bf16.mxu0 0
        %1075 = vmatpush1.bf16.msra.mxu0 0
        %1076 = vmatprep.subr.bf16.mxu0 0
        %1077 = vmatpush1.bf16.msra.mxu0 0
        %1078 = vmatprep.subr.bf16.mxu0 0
        %1079 = vmatpush1.bf16.msra.mxu0 0
        %1080 = vmatprep.subr.bf16.mxu0 0
        %1081 = vmatpush1.bf16.msra.mxu0 0
        %1082 = vmatprep.subr.bf16.mxu0 0
        %1083 = vmatpush1.bf16.msra.mxu0 0
        %1084 = vmatprep.subr.bf16.mxu0 %v1030
        %1085 = vmatpush1.bf16.msra.mxu0 %v1029
        %1086 = vmatprep.subr.bf16.mxu0 %v1028
        %1087 = vmatpush1.bf16.msra.mxu0 %v1027
        %1088 = vmatprep.subr.bf16.mxu0 0
        %1089 = vmatpush2.bf16.msra.mxu0 0
        %1090 = vmatprep.subr.bf16.mxu0 0
        %1091 = vmatpush2.bf16.msra.mxu0 0
        %1092 = vmatprep.subr.bf16.mxu0 0
        %1093 = vmatpush2.bf16.msra.mxu0 0
        %1094 = vmatprep.subr.bf16.mxu0 0
        %1095 = vmatpush2.bf16.msra.mxu0 0
        %1096 = vmatprep.subr.bf16.mxu0 0
        %1097 = vmatpush2.bf16.msra.mxu0 0
        %1098 = vmatprep.subr.bf16.mxu0 0
        %1099 = vmatpush2.bf16.msra.mxu0 0
        %1100 = vmatprep.subr.bf16.mxu0 0
        %1101 = vmatpush2.bf16.msra.mxu0 0
        %1102 = vmatprep.subr.bf16.mxu0 0
        %1103 = vmatpush2.bf16.msra.mxu0 0
        %1104 = vmatprep.mubr.bf16.mxu0 0
        %1105 = vmatmul.mubr.bf16.gmra.mxu0 %v1067
        %v1106 = vpop.f32.mrf.mxu0
        %v1107 = vadd.f32 %v1038, %v1106
        %v1108 = vpop.f32.mrf.mxu0
        %v1109 = vadd.f32 %v1038, %v1108
        %v1110 = vpop.f32.mrf.mxu0
        %v1111 = vadd.f32 %v1043, %v1110
        %v1112 = vpop.f32.mrf.mxu0
        %v1113 = vadd.f32 %v1043, %v1112
        %1114 = vmatprep.mubr.bf16.mxu0 0
        %1115 = vmatmul.mubr.bf16.gmra.mxu0 %v1070
        %v1116 = vpop.f32.mrf.mxu0
        %v1117 = vadd.f32 %v1048, %v1116
        %v1118 = vpop.f32.mrf.mxu0
        %v1119 = vadd.f32 %v1048, %v1118
        %v1120 = vpop.f32.mrf.mxu0
        %v1121 = vadd.f32 %v1053, %v1120
        %v1122 = vpop.f32.mrf.mxu0
        %v1123 = vadd.f32 %v1053, %v1122
        %1124 = vdwg.mxu0
        %v1125 = vmax.f32 %v1107, 0.0
        %v1126 = vmax.f32 %v1109, 0.0
        %v1127 = vmax.f32 %v1111, 0.0
        %v1128 = vmax.f32 %v1113, 0.0
        %v1129 = vmax.f32 %v1117, 0.0
        %v1130 = vmax.f32 %v1119, 0.0
        %v1131 = vmax.f32 %v1121, 0.0
        %v1132 = vmax.f32 %v1123, 0.0
        %v1133 = vld [vmem:[%s9] sm:$0x1]
        %v1134 = vpack.c.bf16 %v1127, %v1125
        %v1135 = vpack.c.bf16 %v1128, %v1126
        %v1136 = vpack.c.bf16 %v1131, %v1129
        %v1137 = vpack.c.bf16 %v1132, %v1130
        %v1138 = vld [vmem:[#allocation2] sm:$0x1]
        %1140 = vset.pattern.permute.xlu0 0
        %1141 = vperm.xlu0 %1140, %v1138
        %v1142 = vpop.permute.xlu0 %1141
        %v1144 = vlaneseq
        %v1145 = vshrl.u32 %v1144, 7
        %v1146 = vsub.s32 0, %v1145
        %v1147 = vrot.slane %v1142, %v1146
        %v1149 = vsel %vm1065, %v1133, 0
        %1151 = vmatprep.subr.bf16.mxu0 0
        %1152 = vmatpush1.bf16.msra.mxu0 0
        %1153 = vmatprep.subr.bf16.mxu0 0
        %1154 = vmatpush1.bf16.msra.mxu0 0
        %1155 = vmatprep.subr.bf16.mxu0 0
        %1156 = vmatpush1.bf16.msra.mxu0 0
        %1157 = vmatprep.subr.bf16.mxu0 0
        %1158 = vmatpush1.bf16.msra.mxu0 0
        %1159 = vmatprep.subr.bf16.mxu0 0
        %1160 = vmatpush1.bf16.msra.mxu0 0
        %1161 = vmatprep.subr.bf16.mxu0 0
        %1162 = vmatpush1.bf16.msra.mxu0 0
        %1163 = vmatprep.subr.bf16.mxu0 %v1137
        %1164 = vmatpush1.bf16.msra.mxu0 %v1136
        %1165 = vmatprep.subr.bf16.mxu0 %v1135
        %1166 = vmatpush1.bf16.msra.mxu0 %v1134
        %1167 = vmatprep.subr.bf16.mxu0 0
        %1168 = vmatpush2.bf16.msra.mxu0 0
        %1169 = vmatprep.subr.bf16.mxu0 0
        %1170 = vmatpush2.bf16.msra.mxu0 0
        %1171 = vmatprep.subr.bf16.mxu0 0
        %1172 = vmatpush2.bf16.msra.mxu0 0
        %1173 = vmatprep.subr.bf16.mxu0 0
        %1174 = vmatpush2.bf16.msra.mxu0 0
        %1175 = vmatprep.subr.bf16.mxu0 0
        %1176 = vmatpush2.bf16.msra.mxu0 0
        %1177 = vmatprep.subr.bf16.mxu0 0
        %1178 = vmatpush2.bf16.msra.mxu0 0
        %1179 = vmatprep.subr.bf16.mxu0 0
        %1180 = vmatpush2.bf16.msra.mxu0 0
        %1181 = vmatprep.subr.bf16.mxu0 0
        %1182 = vmatpush2.bf16.msra.mxu0 0
        %1183 = vmatprep.mubr.bf16.mxu0 0
        %1184 = vmatmul.mubr.bf16.gmra.mxu0 %v1149
        %v1185 = vpop.f32.mrf.mxu0
        %v1186 = vadd.f32 %v1147, %v1185
        %v1187 = vpop.f32.mrf.mxu0
        %v1188 = vadd.f32 %v1147, %v1187
        %v1189 = vpop.f32.mrf.mxu0
        %v1190 = vpop.f32.mrf.mxu0
        %1191 = vdwg.mxu0
        %v1194 = vcombine.low %v1186, %v1188
        %v1196 = vunpack.c.l.s4 1966171168
        %v1197 = vunpack.c.0.s8 %v1196
        %v1198 = vlaneseq
        %v1199 = vshrl.u32 %v1198, 7
        %v1200 = vsub.s32 %v1197, %v1199
        %v1201 = vrot.slane %v1194, %v1200
        %v1203 = vunpack.c.l.s4 1966171168
        %v1204 = vunpack.c.0.s8 %v1203
        %v1205 = vlaneseq
        %v1206 = vshrl.u32 %v1205, 7
        %v1207 = vsub.s32 %v1204, %v1206
        %v1208 = vrot.slane %v1201, %v1207
        %v1210 = vlaneseq
        %vm1211 = vcmp.ge.s32.totalorder %v1210, 0
        %vm1212 = vcmp.lt.s32.totalorder %v1210, 256
        %vm1213 = vmand %vm1211, %vm1212
        %1214 = vst.msk [vmem:[%s422] sm:$0x3] %vm1213, %v1208
        %s1215 = sand.u32 %s276, 1
        %s1216 = scalar_lea.sflag [#allocation4], %s1215
        %s1217 = sand.u32 %s276, 1
        %s1218 = smul.addr %s1217, 2
        %s1219 = scalar_lea.vmem [#allocation3], %s1218
        // Predicated region
        $region65: #{tpu_custom_call.1} parent=63 // pred_check
          %p1220 = pneg %p286
        $region66: #{tpu_custom_call.1} parent=63 // pred_check_branch
          %1222 = sbr.rel (%p1220) target = $region68
        $region67: #{tpu_custom_call.1} parent=63 // pred_region
          %s1223 = smul.u32 2, %s27
          %s1224 = ssub.s32 3, %s1223
          %p1225 = scmp.lt.s32.totalorder %s1224, 2
          %s1226 = scalar_select %p1225, %s1224, 2
          %s1227 = smul.u32 16, %s1226
          %s1229 = ssub.s32 32, %s1227
          %1230 = vsyncadd %s1216, %s1229
          %p1231 = scmp.ne.s32.totalorder 0, %s1227
          %s1232 = smul.addr %s1223, 16
          %s1233 = scalar_lea.hbm %s11, %s1232
          %s1234 = sshll.u32 %s1226, 4
          %s1235 = sshll.u32 %s1219, 4
          %s1236 = int_to_ptr.vmem [resolvable:$true] %s1235
          %1238 = dma.vmem_to_hbm [thread:$0]  (%p1231), %s1236, %s1234, %s1233, %s1216
        $region68: #{tpu_custom_call.1} parent=63 // pred_fallthru
          _
      $region64: #{tpu_custom_call.1} parent=5 // pred_fallthru
        _
      %p1239 = scmp.le.s32.totalorder 2, %s22
      // Predicated region
      $region69: #{tpu_custom_call.1} parent=5 // pred_check
        %p1240 = pneg %p1239
      $region70: #{tpu_custom_call.1} parent=5 // pred_check_branch
        %1242 = sbr.rel (%p1240) target = $region72
      $region71: #{tpu_custom_call.1} parent=5 // pred_region
        %s1243 = ssub.s32 %s22, 2
        // Predicated region
        $region73: #{tpu_custom_call.1} parent=71 // pred_check
          %p1244 = pneg %p292
        $region74: #{tpu_custom_call.1} parent=71 // pred_check_branch
          %1246 = sbr.rel (%p1244) target = $region76
        $region75: #{tpu_custom_call.1} parent=71 // pred_region
          %s1247 = sand.u32 %s277, 1
          %s1248 = scalar_lea.sflag [#allocation4], %s1247
          %s1249 = sand.u32 %s277, 1
          %s1250 = smul.addr %s1249, 2
          %s1251 = scalar_lea.vmem [#allocation3], %s1250
          %1252 = dma.done %s1248, 32
        $region76: #{tpu_custom_call.1} parent=71 // pred_fallthru
          _
      $region72: #{tpu_custom_call.1} parent=5 // pred_fallthru
        _
    $region6: #{tpu_custom_call.1} parent=1 // loop_footer
      %s26 = sadd.s32 1, %s22
    $region7: #{tpu_custom_call.1} parent=1 // loop_footer_branch
      %21 = sbr.rel target = $region3
    $region8: #{tpu_custom_call.1} parent=1 // loop_exit
      _
    %1253 = vsyncpa [#allocation4], 1
    %s1254 = scalar_lea.sflag [#allocation4], 1
    %1255 = vsyncpa %s1254, 1

</llo_original>
